<compile_context>
chip_gen: v5e
topology: v5e:2x2
jax: 0.10.0
libtpu: 0.0.40
codegen_flags: <defaults>
</compile_context>

<pallas_src>
import math
import jax
import jax.numpy as jnp
from jax.experimental import pallas as pl
from jax.experimental.pallas import tpu as pltpu

_INV_SQRT2 = 0.7071067811865475
_MIB = 1024 * 1024


def _lm_head_kernel(x_ref, w1_ref, b1_ref, gamma_ref, beta_ref,
                    emb_ref, dbias_ref, out_ref, h_scratch):
    """Grid = (num_m_tiles, num_v_tiles); v is the inner ("arbitrary") axis.

    On v == 0 the transform (dense + gelu + layernorm) for this token tile is
    computed once and cached in VMEM scratch (in the decoder compute dtype);
    every v tile reuses it for the decoder matmul against its vocab slice.
    """
    v = pl.program_id(1)

    @pl.when(v == 0)
    def _():
        # Dense in the operands' native dtype (bf16 MXU path for bf16 inputs),
        # f32 accumulation; GELU + LayerNorm math stays in f32.
        h = jnp.dot(x_ref[...], w1_ref[...],
                    preferred_element_type=jnp.float32)        # (tm, H) f32
        h = h + b1_ref[...].astype(jnp.float32)                # (1, H) bcast
        # gelu (erf formulation, exactly as in the PyTorch module)
        h = h * 0.5 * (1.0 + jax.lax.erf(h * _INV_SQRT2))
        # LayerNorm over the hidden dim, eps = 1e-12
        mean = jnp.mean(h, axis=-1, keepdims=True)
        var = jnp.mean(jnp.square(h - mean), axis=-1, keepdims=True)
        h = (h - mean) * jax.lax.rsqrt(var + 1e-12)
        h = h * gamma_ref[...].astype(jnp.float32) + beta_ref[...].astype(jnp.float32)
        h_scratch[...] = h.astype(h_scratch.dtype)

    # decoder: (tm, H) contracted with embedding tile (tv, H) along H -> (tm, tv)
    y = jax.lax.dot_general(
        h_scratch[...], emb_ref[...],
        dimension_numbers=(((1,), (1,)), ((), ())),
        preferred_element_type=jnp.float32)
    y = y + dbias_ref[...].astype(jnp.float32)
    out_ref[...] = y.astype(out_ref.dtype)


def _round_up(a, b):
    return (a + b - 1) // b * b


def _auto_config():
    """Generation-aware defaults: (tm, tv, vmem_limit_bytes, min_m_tiles)."""
    try:
        vmem_cap = int(pltpu.get_tpu_info().vmem_capacity_bytes)
    except Exception:
        vmem_cap = 0
    if vmem_cap and vmem_cap <= 64 * _MIB:
        # v7x-class: 64 MiB VMEM per TensorCore, 2 TCs/chip.  Leave headroom
        # for compiler-internal scratch and feed both cores.
        return 512, 1024, 52 * _MIB, 2
    if vmem_cap >= 128 * _MIB:
        # v5e / v6e: 128 MiB VMEM -> large token tiles to amortize the
        # decoder-weight stream (v6e roofline wants tm >~ 670 for bf16).
        return 768, 1024, 100 * _MIB, 1
    # Unknown / query failed: conservative settings that fit everywhere.
    return 512, 1024, 48 * _MIB, 1


def bert_lm_prediction_head(hidden_states, params, *, tm=None, tv=None,
                            vmem_limit_bytes=None):
    """hidden_states: [B, S, H] -> logits [B, S, V]."""
    B, S, H = hidden_states.shape
    w1 = params["dense_w"]          # [H, H]  (in, out)
    b1 = params["dense_b"]          # [H]
    gamma = params["ln_gamma"]      # [H]
    beta = params["ln_beta"]        # [H]
    emb = params["embedding"]       # [V, H]  (tied embedding table, NOT transposed)
    out_bias = params["out_bias"]   # [V]
    V = emb.shape[0]
    M = B * S

    tm_auto, tv_auto, vmem_auto, min_m_tiles = _auto_config()
    tm = tm_auto if tm is None else tm
    tv = tv_auto if tv is None else tv
    vmem_limit_bytes = vmem_auto if vmem_limit_bytes is None else vmem_limit_bytes

    x2d = hidden_states.reshape(M, H)

    # Sublane tile for x / h_scratch blocks: 8 (f32), 16 (bf16), 32 (8-bit).
    sub = max(8, 32 // jnp.dtype(hidden_states.dtype).itemsize)
    tm_eff = min(tm, _round_up(M, sub))
    # Dual-TensorCore chips: make sure the 'parallel' m axis has >= 2 tiles
    # when the problem is big enough, so both cores get work.
    if min_m_tiles > 1 and pl.cdiv(M, tm_eff) < min_m_tiles and M >= 512:
        tm_eff = _round_up(pl.cdiv(M, min_m_tiles), sub)
    tv_eff = min(tv, _round_up(V, 128))

    # Ragged final blocks are handled by Pallas (masked loads/stores) --
    # no per-call padding of emb / out_bias and no output slice.
    grid = (pl.cdiv(M, tm_eff), pl.cdiv(V, tv_eff))

    b1_2d = b1.reshape(1, H)
    gamma_2d = gamma.reshape(1, H)
    beta_2d = beta.reshape(1, H)
    dbias_2d = out_bias.reshape(1, V)

    # Decoder compute dtype follows the embedding dtype (bf16 embeddings give a
    # bf16 MXU path with f32 accumulation; the transform math stays f32).
    h_dtype = emb.dtype

    itemsize = lambda a: jnp.dtype(a.dtype).itemsize
    flops = 2.0 * M * H * (H + V)
    bytes_accessed = (M * H * itemsize(x2d)
                      + H * H * itemsize(w1)
                      + grid[0] * V * H * itemsize(emb)   # emb streamed per m-tile
                      + M * V * itemsize(hidden_states))
    cost = pl.CostEstimate(flops=int(flops),
                           transcendentals=int(M * H),
                           bytes_accessed=int(bytes_accessed))

    out = pl.pallas_call(
        _lm_head_kernel,
        out_shape=jax.ShapeDtypeStruct((M, V), hidden_states.dtype),
        grid_spec=pltpu.PrefetchScalarGridSpec(
            num_scalar_prefetch=0,
            grid=grid,
            in_specs=[
                pl.BlockSpec((tm_eff, H), lambda m, v: (m, 0)),    # x tile
                pl.BlockSpec((H, H), lambda m, v: (0, 0)),         # dense weight
                pl.BlockSpec((1, H), lambda m, v: (0, 0)),         # dense bias
                pl.BlockSpec((1, H), lambda m, v: (0, 0)),         # LN gamma
                pl.BlockSpec((1, H), lambda m, v: (0, 0)),         # LN beta
                pl.BlockSpec((tv_eff, H), lambda m, v: (v, 0)),    # embedding tile [tv, H]
                pl.BlockSpec((1, tv_eff), lambda m, v: (0, v)),    # output bias tile
            ],
            out_specs=pl.BlockSpec((tm_eff, tv_eff), lambda m, v: (m, v)),
            scratch_shapes=[pltpu.VMEM((tm_eff, H), h_dtype)],
        ),
        compiler_params=pltpu.CompilerParams(
            dimension_semantics=("parallel", "arbitrary"),
            vmem_limit_bytes=vmem_limit_bytes),
        cost_estimate=cost,
    )(x2d, w1, b1_2d, gamma_2d, beta_2d, emb, dbias_2d)

    return out.reshape(B, S, V)


def _reference(hidden_states, params):
    """Pure-JAX reference for correctness checking (f32 math)."""
    x = hidden_states.astype(jnp.float32)
    h = x @ params["dense_w"].astype(jnp.float32) + params["dense_b"].astype(jnp.float32)
    h = h * 0.5 * (1.0 + jax.lax.erf(h / math.sqrt(2.0)))
    mean = jnp.mean(h, axis=-1, keepdims=True)
    var = jnp.mean(jnp.square(h - mean), axis=-1, keepdims=True)
    h = (h - mean) / jnp.sqrt(var + 1e-12)
    h = h * params["ln_gamma"].astype(jnp.float32) + params["ln_beta"].astype(jnp.float32)
    y = h @ params["embedding"].astype(jnp.float32).T + params["out_bias"].astype(jnp.float32)
    return y


if __name__ == "__main__":
    # Small, deterministic shapes: batch=2, seq=8, hidden=128, vocab=320
    # (vocab deliberately NOT a multiple of 128*k tile to exercise the ragged
    #  final-block path, like real BERT vocab sizes such as 30522).
    B, S, H, V = 2, 8, 128, 320
    key = jax.random.PRNGKey(0)
    k_x, k_w1, k_b1, k_emb = jax.random.split(key, 4)

    hidden_states = jax.random.normal(k_x, (B, S, H), dtype=jnp.float32)
    params = {
        "dense_w": jax.random.normal(k_w1, (H, H), dtype=jnp.float32) * 0.02,
        "dense_b": jax.random.normal(k_b1, (H,), dtype=jnp.float32) * 0.02,
        "ln_gamma": jnp.ones((H,), dtype=jnp.float32),
        "ln_beta": jnp.zeros((H,), dtype=jnp.float32),
        "embedding": jax.random.normal(k_emb, (V, H), dtype=jnp.float32) * 0.02,
        "out_bias": jnp.zeros((V,), dtype=jnp.float32),  # nn.Parameter(torch.zeros(V))
    }

    # --- f32 path: tight correctness check ---
    logits = bert_lm_prediction_head(hidden_states, params)
    logits = jax.block_until_ready(logits)
    ref = _reference(hidden_states, params)
    assert logits.shape == (B, S, V)
    assert jnp.allclose(logits, ref, atol=1e-4, rtol=1e-4), "f32 mismatch vs reference"

    # --- bf16 path: both GEMMs run on the bf16 MXU path with f32 accumulation ---
    hs_bf16 = hidden_states.astype(jnp.bfloat16)
    params_bf16 = {k: v.astype(jnp.bfloat16) for k, v in params.items()}
    logits_bf16 = bert_lm_prediction_head(hs_bf16, params_bf16)
    logits_bf16 = jax.block_until_ready(logits_bf16)
    ref_bf16 = _reference(hs_bf16, params_bf16)
    assert logits_bf16.shape == (B, S, V)
    assert jnp.allclose(logits_bf16.astype(jnp.float32), ref_bf16,
                        atol=5e-2, rtol=5e-2), "bf16 mismatch vs reference"

    print("KERNEL_OK")
</pallas_src>

<mosaic_0001>
module attributes {stable_mosaic.version = 11 : i64} {
  func.func @_lm_head_kernel(%arg0: i32, %arg1: i32, %arg2: memref<16x128xf32, #tpu.memory_space<vmem>>, %arg3: memref<128x128xf32, #tpu.memory_space<vmem>>, %arg4: memref<1x128xf32, #tpu.memory_space<vmem>>, %arg5: memref<1x128xf32, #tpu.memory_space<vmem>>, %arg6: memref<1x128xf32, #tpu.memory_space<vmem>>, %arg7: memref<384x128xf32, #tpu.memory_space<vmem>>, %arg8: memref<1x384xf32, #tpu.memory_space<vmem>>, %arg9: memref<16x384xf32, #tpu.memory_space<vmem>>, %arg10: memref<16x128xf32, #tpu.memory_space<vmem>>) attributes {dimension_semantics = [#tpu.dimension_semantics<parallel>, #tpu.dimension_semantics<arbitrary>], iteration_bounds = array<i64: 1, 1>, scalar_prefetch = 0 : i64, scratch_operands = 1 : i64, tpu.core_type = #tpu.core_type<tc>, window_params = [{transform_indices = @transform_0, window_bounds = array<i64: 16, 128>}, {pipeline_mode = #tpu.pipeline_mode<synchronous>, transform_indices = @transform_1, window_bounds = array<i64: 128, 128>}, {pipeline_mode = #tpu.pipeline_mode<synchronous>, transform_indices = @transform_2, window_bounds = array<i64: 1, 128>}, {pipeline_mode = #tpu.pipeline_mode<synchronous>, transform_indices = @transform_3, window_bounds = array<i64: 1, 128>}, {pipeline_mode = #tpu.pipeline_mode<synchronous>, transform_indices = @transform_4, window_bounds = array<i64: 1, 128>}, {transform_indices = @transform_5, window_bounds = array<i64: 384, 128>}, {transform_indices = @transform_6, window_bounds = array<i64: 1, 384>}, {transform_indices = @transform_7, window_bounds = array<i64: 16, 384>}]} {
    %c0_i32 = arith.constant 0 : i32
    %0 = arith.cmpi eq, %arg1, %c0_i32 : i32
    %1 = arith.extui %0 : i1 to i32
    %c0_i32_0 = arith.constant 0 : i32
    %2 = arith.cmpi ne, %1, %c0_i32_0 : i32
    scf.if %2 {
      %c0_8 = arith.constant 0 : index
      %c0_9 = arith.constant 0 : index
      %10 = vector.load %arg2[%c0_8, %c0_9] : memref<16x128xf32, #tpu.memory_space<vmem>>, vector<16x128xf32>
      %c0_10 = arith.constant 0 : index
      %c0_11 = arith.constant 0 : index
      %11 = vector.load %arg3[%c0_10, %c0_11] : memref<128x128xf32, #tpu.memory_space<vmem>>, vector<128x128xf32>
      %cst_12 = arith.constant dense<0.000000e+00> : vector<16x128xf32>
      %12 = tpu.matmul %10, %11, %cst_12 {dimension_numbers = #tpu.dot_dimension_numbers<[1], [0], [0], [1], [0, 0, 1, 1], [], []>} : vector<16x128xf32>, vector<128x128xf32>, vector<16x128xf32> -> vector<16x128xf32>
      %c0_13 = arith.constant 0 : index
      %c0_14 = arith.constant 0 : index
      %13 = vector.load %arg4[%c0_13, %c0_14] : memref<1x128xf32, #tpu.memory_space<vmem>>, vector<1x128xf32>
      %14 = vector.broadcast %13 : vector<1x128xf32> to vector<16x128xf32>
      %15 = arith.addf %12, %14 : vector<16x128xf32>
      %cst_15 = arith.constant 5.000000e-01 : f32
      %16 = vector.broadcast %cst_15 : f32 to vector<16x128xf32>
      %17 = arith.mulf %15, %16 : vector<16x128xf32>
      %cst_16 = arith.constant 0.707106769 : f32
      %18 = vector.broadcast %cst_16 : f32 to vector<16x128xf32>
      %19 = arith.mulf %15, %18 : vector<16x128xf32>
      %20 = math.erf %19 : vector<16x128xf32>
      %cst_17 = arith.constant 1.000000e+00 : f32
      %21 = vector.broadcast %cst_17 : f32 to vector<16x128xf32>
      %22 = arith.addf %21, %20 : vector<16x128xf32>
      %23 = arith.mulf %17, %22 : vector<16x128xf32>
      %cst_18 = arith.constant dense<0.000000e+00> : vector<16xf32>
      %24 = vector.multi_reduction <add>, %23, %cst_18 [1] : vector<16x128xf32> to vector<16xf32>
      %25 = vector.shape_cast %24 : vector<16xf32> to vector<16x1xf32>
      %cst_19 = arith.constant 1.280000e+02 : f32
      %26 = vector.broadcast %cst_19 : f32 to vector<16x1xf32>
      %27 = arith.divf %25, %26 : vector<16x1xf32>
      %28 = vector.broadcast %27 : vector<16x1xf32> to vector<16x128xf32>
      %29 = arith.subf %23, %28 : vector<16x128xf32>
      %30 = arith.mulf %29, %29 : vector<16x128xf32>
      %cst_20 = arith.constant dense<0.000000e+00> : vector<16xf32>
      %31 = vector.multi_reduction <add>, %30, %cst_20 [1] : vector<16x128xf32> to vector<16xf32>
      %32 = vector.shape_cast %31 : vector<16xf32> to vector<16x1xf32>
      %cst_21 = arith.constant 1.280000e+02 : f32
      %33 = vector.broadcast %cst_21 : f32 to vector<16x1xf32>
      %34 = arith.divf %32, %33 : vector<16x1xf32>
      %35 = vector.broadcast %27 : vector<16x1xf32> to vector<16x128xf32>
      %36 = arith.subf %23, %35 : vector<16x128xf32>
      %cst_22 = arith.constant 9.99999996E-13 : f32
      %37 = vector.broadcast %cst_22 : f32 to vector<16x1xf32>
      %38 = arith.addf %34, %37 : vector<16x1xf32>
      %39 = math.rsqrt %38 : vector<16x1xf32>
      %40 = vector.broadcast %39 : vector<16x1xf32> to vector<16x128xf32>
      %41 = arith.mulf %36, %40 : vector<16x128xf32>
      %c0_23 = arith.constant 0 : index
      %c0_24 = arith.constant 0 : index
      %42 = vector.load %arg5[%c0_23, %c0_24] : memref<1x128xf32, #tpu.memory_space<vmem>>, vector<1x128xf32>
      %43 = vector.broadcast %42 : vector<1x128xf32> to vector<16x128xf32>
      %44 = arith.mulf %41, %43 : vector<16x128xf32>
      %c0_25 = arith.constant 0 : index
      %c0_26 = arith.constant 0 : index
      %45 = vector.load %arg6[%c0_25, %c0_26] : memref<1x128xf32, #tpu.memory_space<vmem>>, vector<1x128xf32>
      %46 = vector.broadcast %45 : vector<1x128xf32> to vector<16x128xf32>
      %47 = arith.addf %44, %46 : vector<16x128xf32>
      %c0_27 = arith.constant 0 : index
      %c0_28 = arith.constant 0 : index
      %48 = vector.load %arg10[%c0_27, %c0_28] : memref<16x128xf32, #tpu.memory_space<vmem>>, vector<16x128xf32>
      tpu.vector_store %arg10[%c0_27, %c0_28], %47 {strides = array<i32>} : memref<16x128xf32, #tpu.memory_space<vmem>>, vector<16x128xf32>,
    } else {
    }
    %c0 = arith.constant 0 : index
    %c0_1 = arith.constant 0 : index
    %3 = vector.load %arg10[%c0, %c0_1] : memref<16x128xf32, #tpu.memory_space<vmem>>, vector<16x128xf32>
    %c0_2 = arith.constant 0 : index
    %c0_3 = arith.constant 0 : index
    %4 = vector.load %arg7[%c0_2, %c0_3] : memref<384x128xf32, #tpu.memory_space<vmem>>, vector<384x128xf32>
    %cst = arith.constant dense<0.000000e+00> : vector<16x384xf32>
    %5 = tpu.matmul %3, %4, %cst {dimension_numbers = #tpu.dot_dimension_numbers<[1], [1], [0], [0], [0, 0, 1, 0], [], []>} : vector<16x128xf32>, vector<384x128xf32>, vector<16x384xf32> -> vector<16x384xf32>
    %c0_4 = arith.constant 0 : index
    %c0_5 = arith.constant 0 : index
    %6 = vector.load %arg8[%c0_4, %c0_5] : memref<1x384xf32, #tpu.memory_space<vmem>>, vector<1x384xf32>
    %7 = vector.broadcast %6 : vector<1x384xf32> to vector<16x384xf32>
    %8 = arith.addf %5, %7 : vector<16x384xf32>
    %c0_6 = arith.constant 0 : index
    %c0_7 = arith.constant 0 : index
    %9 = vector.load %arg9[%c0_6, %c0_7] : memref<16x384xf32, #tpu.memory_space<vmem>>, vector<16x384xf32>
    tpu.vector_store %arg9[%c0_6, %c0_7], %8 {strides = array<i32>} : memref<16x384xf32, #tpu.memory_space<vmem>>, vector<16x384xf32>,
    return
  }
  func.func @transform_0(%arg0: i32, %arg1: i32) -> (i32, i32) {
    %c0_i32 = arith.constant 0 : i32
    %c0_i32_0 = arith.constant 0 : i32
    return %arg0, %c0_i32 : i32, i32
  }
  func.func @transform_1(%arg0: i32, %arg1: i32) -> (i32, i32) {
    %c0_i32 = arith.constant 0 : i32
    %c0_i32_0 = arith.constant 0 : i32
    %c0_i32_1 = arith.constant 0 : i32
    return %c0_i32, %c0_i32_0 : i32, i32
  }
  func.func @transform_2(%arg0: i32, %arg1: i32) -> (i32, i32) {
    %c0_i32 = arith.constant 0 : i32
    %c0_i32_0 = arith.constant 0 : i32
    %c0_i32_1 = arith.constant 0 : i32
    return %c0_i32, %c0_i32_0 : i32, i32
  }
  func.func @transform_3(%arg0: i32, %arg1: i32) -> (i32, i32) {
    %c0_i32 = arith.constant 0 : i32
    %c0_i32_0 = arith.constant 0 : i32
    %c0_i32_1 = arith.constant 0 : i32
    return %c0_i32, %c0_i32_0 : i32, i32
  }
  func.func @transform_4(%arg0: i32, %arg1: i32) -> (i32, i32) {
    %c0_i32 = arith.constant 0 : i32
    %c0_i32_0 = arith.constant 0 : i32
    %c0_i32_1 = arith.constant 0 : i32
    return %c0_i32, %c0_i32_0 : i32, i32
  }
  func.func @transform_5(%arg0: i32, %arg1: i32) -> (i32, i32) {
    %c0_i32 = arith.constant 0 : i32
    %c0_i32_0 = arith.constant 0 : i32
    return %arg1, %c0_i32 : i32, i32
  }
  func.func @transform_6(%arg0: i32, %arg1: i32) -> (i32, i32) {
    %c0_i32 = arith.constant 0 : i32
    %c0_i32_0 = arith.constant 0 : i32
    return %c0_i32, %arg1 : i32, i32
  }
  func.func @transform_7(%arg0: i32, %arg1: i32) -> (i32, i32) {
    %c0_i32 = arith.constant 0 : i32
    return %arg0, %arg1 : i32, i32
  }
}

</mosaic_0001>

<llo_original>
// kernel: tpu_custom_call.1
$region0: #{tpu_custom_call.1}
  #allocation0 [shape = 'u32[]', space=smem, size = 0x4, offset = 0x4, fixed_abs, tag = 'smem constant byte address 0x4 - core index']
  #allocation1 [shape = 'u32[72,128]{1,0:T(1,128)}', space=vmem, size = 0x9000, scoped, tag = 'internal scratch']
  #allocation2 [shape = 'f32[16,128]{1,0:T(8,128)}', space=vmem, size = 0x2000, scoped, tag = 'scratch operand']
  %s0 = inlined_call_operand.hbm [shape: f32[16,128], index: 0, kind: input, shape index: {}]
  %s1 = inlined_call_operand.hbm [shape: f32[128,128], index: 1, kind: input, shape index: {}]
  %s2 = inlined_call_operand.vmem [shape: f32[1,128], index: 2, kind: input, shape index: {}]
  %s3 = inlined_call_operand.vmem [shape: f32[1,128], index: 3, kind: input, shape index: {}]
  %s4 = inlined_call_operand.hbm [shape: f32[1,128], index: 4, kind: input, shape index: {}]
  %s5 = inlined_call_operand.hbm [shape: f32[320,128], index: 5, kind: input, shape index: {}]
  %s6 = inlined_call_operand.vmem [shape: f32[1,320], index: 6, kind: input, shape index: {}]
  %s7 = inlined_call_operand.hbm [shape: f32[16,320], index: 7, kind: output, shape index: {}]
  %s8 = sld [smem:[#allocation0]]
  $region58: #{tpu_custom_call.1} parent=0
    _
  %s10 = ssub.s32 1, %s8
  %s11 = scalar_select 0, %s10, %s8
  $region1: #{tpu_custom_call.1} parent=0
    #allocation3 [shape = 'u8[8192]{0}', space=vmem, size = 0x2000, scoped, tag = 'input window, operand 0, single buffered']
    #allocation4 [shape = 's32[1]{0}', space=sflag, size = 0x4, scoped, tag = 'scoped memory for tpu_custom_call.1']
    #allocation5 [shape = 's32[1]{0}', space=sflag, size = 0x4, scoped, tag = 'scoped memory for tpu_custom_call.1']
    #allocation6 [shape = 'u8[65536]{0}', space=vmem, size = 0x10000, scoped, tag = 'input window, operand 1, single buffered']
    #allocation7 [shape = 's32[1]{0}', space=sflag, size = 0x4, scoped, tag = 'scoped memory for tpu_custom_call.1']
    #allocation8 [shape = 'u8[512]{0}', space=vmem, size = 0x400, scoped, tag = 'input window, operand 4, single buffered']
    #allocation9 [shape = 'u8[196608]{0}', space=vmem, size = 0x30000, scoped, tag = 'input window, operand 5, single buffered']
    #allocation10 [shape = 's32[1]{0}', space=sflag, size = 0x4, scoped, tag = 'scoped memory for tpu_custom_call.1']
    #allocation11 [shape = 'u8[24576]{0}', space=vmem, size = 0x6000, scoped, tag = 'output window, operand 0, single buffered']
    %12 = vsyncpa [#allocation4], 0
    %13 = vsyncpa [#allocation7], 0
    %14 = vsyncpa [#allocation10], 0
    %15 = vsyncpa [#allocation5], 0
    // Predicated region
    $region2: #{tpu_custom_call.1} parent=1 // pred_check
      _
    $region3: #{tpu_custom_call.1} parent=1 // pred_check_branch
      %17 = sbr.rel (0) target = $region5
    $region4: #{tpu_custom_call.1} parent=1 // pred_region
      %19 = vsyncadd [#allocation4], 0
      %s20 = sshll.u32 %s0, 4
      %s21 = int_to_ptr.hbm [resolvable:$true] %s20
      %s22 = sshll.u32 [#allocation3], 4
      %s23 = int_to_ptr.vmem [resolvable:$true] %s22
      %28 = dma.hbm_to_vmem [thread:$0]  %s21, 256, %s23, [#allocation4], 128, 128, 8
    $region5: #{tpu_custom_call.1} parent=1 // pred_fallthru
      _
    // Predicated region
    $region6: #{tpu_custom_call.1} parent=1 // pred_check
      _
    $region7: #{tpu_custom_call.1} parent=1 // pred_check_branch
      %30 = sbr.rel (0) target = $region9
    $region8: #{tpu_custom_call.1} parent=1 // pred_region
      %32 = vsyncadd [#allocation7], 0
      %s33 = sshll.u32 %s1, 4
      %s34 = int_to_ptr.hbm [resolvable:$true] %s33
      %s35 = sshll.u32 [#allocation6], 4
      %s36 = int_to_ptr.vmem [resolvable:$true] %s35
      %41 = dma.hbm_to_vmem [thread:$0]  %s34, 2048, %s36, [#allocation7], 128, 128, 8
    $region9: #{tpu_custom_call.1} parent=1 // pred_fallthru
      _
    // Predicated region
    $region10: #{tpu_custom_call.1} parent=1 // pred_check
      _
    $region11: #{tpu_custom_call.1} parent=1 // pred_check_branch
      %43 = sbr.rel (0) target = $region13
    $region12: #{tpu_custom_call.1} parent=1 // pred_region
      _
    $region13: #{tpu_custom_call.1} parent=1 // pred_fallthru
      _
    // Predicated region
    $region14: #{tpu_custom_call.1} parent=1 // pred_check
      _
    $region15: #{tpu_custom_call.1} parent=1 // pred_check_branch
      %45 = sbr.rel (0) target = $region17
    $region16: #{tpu_custom_call.1} parent=1 // pred_region
      _
    $region17: #{tpu_custom_call.1} parent=1 // pred_fallthru
      _
    // Predicated region
    $region18: #{tpu_custom_call.1} parent=1 // pred_check
      _
    $region19: #{tpu_custom_call.1} parent=1 // pred_check_branch
      %47 = sbr.rel (0) target = $region21
    $region20: #{tpu_custom_call.1} parent=1 // pred_region
      %49 = vsyncadd [#allocation7], 0
      %s51 = sshll.u32 %s4, 4
      %s52 = int_to_ptr.hbm [resolvable:$true] %s51
      %s53 = sshll.u32 [#allocation8], 4
      %s54 = int_to_ptr.vmem [resolvable:$true] %s53
      %56 = dma.hbm_to_vmem [thread:$0]  %s52, 16, %s54, [#allocation7]
    $region21: #{tpu_custom_call.1} parent=1 // pred_fallthru
      _
    // Predicated region
    $region22: #{tpu_custom_call.1} parent=1 // pred_check
      _
    $region23: #{tpu_custom_call.1} parent=1 // pred_check_branch
      %58 = sbr.rel (0) target = $region25
    $region24: #{tpu_custom_call.1} parent=1 // pred_region
      %60 = vsyncadd [#allocation10], 1024
      %s61 = sshll.u32 %s5, 4
      %s62 = int_to_ptr.hbm [resolvable:$true] %s61
      %s63 = sshll.u32 [#allocation9], 4
      %s64 = int_to_ptr.vmem [resolvable:$true] %s63
      %69 = dma.hbm_to_vmem [thread:$0]  %s62, 5120, %s64, [#allocation10], 128, 128, 8
    $region25: #{tpu_custom_call.1} parent=1 // pred_fallthru
      _
    // Predicated region
    $region26: #{tpu_custom_call.1} parent=1 // pred_check
      _
    $region27: #{tpu_custom_call.1} parent=1 // pred_check_branch
      %71 = sbr.rel (0) target = $region29
    $region28: #{tpu_custom_call.1} parent=1 // pred_region
      _
    $region29: #{tpu_custom_call.1} parent=1 // pred_fallthru
      _
    // Predicated region
    $region30: #{tpu_custom_call.1} parent=1 // pred_check
      _
    $region31: #{tpu_custom_call.1} parent=1 // pred_check_branch
      %73 = sbr.rel (0) target = $region33
    $region32: #{tpu_custom_call.1} parent=1 // pred_region
      %75 = dma.done [#allocation4], 256
    $region33: #{tpu_custom_call.1} parent=1 // pred_fallthru
      _
    // Predicated region
    $region34: #{tpu_custom_call.1} parent=1 // pred_check
      _
    $region35: #{tpu_custom_call.1} parent=1 // pred_check_branch
      %77 = sbr.rel (0) target = $region37
    $region36: #{tpu_custom_call.1} parent=1 // pred_region
      %79 = dma.done [#allocation7], 2048
    $region37: #{tpu_custom_call.1} parent=1 // pred_fallthru
      _
    // Predicated region
    $region38: #{tpu_custom_call.1} parent=1 // pred_check
      _
    $region39: #{tpu_custom_call.1} parent=1 // pred_check_branch
      %81 = sbr.rel (0) target = $region41
    $region40: #{tpu_custom_call.1} parent=1 // pred_region
      %83 = dma.done [#allocation7], 16
    $region41: #{tpu_custom_call.1} parent=1 // pred_fallthru
      _
    // Predicated region
    $region42: #{tpu_custom_call.1} parent=1 // pred_check
      _
    $region43: #{tpu_custom_call.1} parent=1 // pred_check_branch
      %85 = sbr.rel (0) target = $region45
    $region44: #{tpu_custom_call.1} parent=1 // pred_region
      %87 = dma.done [#allocation10], 6144
    $region45: #{tpu_custom_call.1} parent=1 // pred_fallthru
      _
    %p88 = scmp.eq.s32.totalorder 0, 0
    // Predicated region
    $region46: #{tpu_custom_call.1} parent=1 // pred_check
      %p89 = pneg %p88
    $region47: #{tpu_custom_call.1} parent=1 // pred_check_branch
      %91 = sbr.rel (%p89) target = $region49
    $region48: #{tpu_custom_call.1} parent=1 // pred_region
      %v92 = vld [vmem:[#allocation3] sm:$0xff]
      %v93 = vld [vmem:[#allocation3 + $0x8] sm:$0xff]
      %v94 = vld [vmem:[#allocation6] sm:$0xff]
      %v95 = vld [vmem:[#allocation6 + $0x8] sm:$0xff]
      %v96 = vld [vmem:[#allocation6 + $0x10] sm:$0xff]
      %v97 = vld [vmem:[#allocation6 + $0x18] sm:$0xff]
      %v98 = vld [vmem:[#allocation6 + $0x20] sm:$0xff]
      %v99 = vld [vmem:[#allocation6 + $0x28] sm:$0xff]
      %v100 = vld [vmem:[#allocation6 + $0x30] sm:$0xff]
      %v101 = vld [vmem:[#allocation6 + $0x38] sm:$0xff]
      %v102 = vld [vmem:[#allocation6 + $0x40] sm:$0xff]
      %v103 = vld [vmem:[#allocation6 + $0x48] sm:$0xff]
      %v104 = vld [vmem:[#allocation6 + $0x50] sm:$0xff]
      %v105 = vld [vmem:[#allocation6 + $0x58] sm:$0xff]
      %v106 = vld [vmem:[#allocation6 + $0x60] sm:$0xff]
      %v107 = vld [vmem:[#allocation6 + $0x68] sm:$0xff]
      %v108 = vld [vmem:[#allocation6 + $0x70] sm:$0xff]
      %v109 = vld [vmem:[#allocation6 + $0x78] sm:$0xff]
      %v110 = vld [vmem:[%s2] sm:$0x1]
      %v112 = vperm.slane %v110, 0
      %114 = vmatpush.msra.mxu0 %v109
      %115 = vmatpush.msra.mxu0 %v108
      %116 = vmatpush.msra.mxu0 %v107
      %117 = vmatpush.msra.mxu0 %v106
      %118 = vmatpush.msra.mxu0 %v105
      %119 = vmatpush.msra.mxu0 %v104
      %120 = vmatpush.msra.mxu0 %v103
      %121 = vmatpush.msra.mxu0 %v102
      %122 = vmatpush.msra.mxu0 %v101
      %123 = vmatpush.msra.mxu0 %v100
      %124 = vmatpush.msra.mxu0 %v99
      %125 = vmatpush.msra.mxu0 %v98
      %126 = vmatpush.msra.mxu0 %v97
      %127 = vmatpush.msra.mxu0 %v96
      %128 = vmatpush.msra.mxu0 %v95
      %129 = vmatpush.msra.mxu0 %v94
      %130 = vmatmul.f32.gmra.mxu0 %v92
      %v131 = vpop.f32.mrf.mxu0
      %v132 = vadd.f32 %v112, %v131
      %133 = vmatmul.f32.gmra.mxu0 %v93
      %v134 = vpop.f32.mrf.mxu0
      %v135 = vadd.f32 %v112, %v134
      %136 = vdwg.mxu0
      %v137 = vmul.f32 %v132, 0.5
      %v138 = vmul.f32 %v135, 0.5
      %v139 = vmul.f32 %v132, 0.70710677
      %v140 = vmul.f32 %v135, 0.70710677
      %v141 = vmul.f32 %v139, %v139
      %v142 = vmin.f32 16.0, %v141
      %v143 = vmul.f32 %v142, 2.1237322e-06
      %v144 = vadd.f32 %v143, 0.00028619796
      %v145 = vmul.f32 %v142, %v144
      %v146 = vadd.f32 %v145, 0.0036580483
      %v147 = vmul.f32 %v142, %v146
      %v148 = vadd.f32 %v147, 0.05243302
      %v149 = vmul.f32 %v142, %v148
      %v150 = vadd.f32 %v149, 0.18741608
      %v151 = vmul.f32 %v142, %v150
      %v152 = vadd.f32 %v151, 1.1283791
      %v153 = vmul.f32 %v139, %v152
      %v154 = vmul.f32 %v142, 3.8918573e-05
      %v155 = vadd.f32 %v154, 0.001143296
      %v156 = vmul.f32 %v142, %v155
      %v157 = vadd.f32 %v156, 0.014752088
      %v158 = vmul.f32 %v142, %v157
      %v159 = vadd.f32 %v158, 0.112945676
      %v160 = vmul.f32 %v142, %v159
      %v161 = vadd.f32 %v160, 0.4994258
      %v162 = vmul.f32 %v142, %v161
      %v163 = vadd.f32 %v162, 1.0
      %v164 = vrcp.pop %v163
      %v165 = vmul.f32 %v163, %v164
      %v166 = vsub.f32 1.0, %v165
      %v167 = vmul.f32 %v164, %v166
      %v168 = vadd.f32 %v164, %v167
      %vm169 = vweird.f32 %v163
      %vm170 = vweird.f32 %v164
      %vm171 = vmor %vm169, %vm170
      %v172 = vsel %vm171, %v164, %v168
      %v173 = vand.u32 2147483647, %v163
      %vm174 = vcmp.eq.f32.partialorder %v173, 8.507059e+37
      %v175 = vand.u32 %v163, 2147483648
      %v176 = vor.u32 1.1754944e-38, %v175
      %v177 = vsel %vm174, %v176, %v172
      %v178 = vmul.f32 %v153, %v177
      %v179 = vmin.f32 %v178, 1.0
      %v180 = vmax.f32 %v179, -1.0
      %v181 = vmul.f32 %v140, %v140
      %v182 = vmin.f32 16.0, %v181
      %v183 = vmul.f32 %v182, 2.1237322e-06
      %v184 = vadd.f32 %v183, 0.00028619796
      %v185 = vmul.f32 %v182, %v184
      %v186 = vadd.f32 %v185, 0.0036580483
      %v187 = vmul.f32 %v182, %v186
      %v188 = vadd.f32 %v187, 0.05243302
      %v189 = vmul.f32 %v182, %v188
      %v190 = vadd.f32 %v189, 0.18741608
      %v191 = vmul.f32 %v182, %v190
      %v192 = vadd.f32 %v191, 1.1283791
      %v193 = vmul.f32 %v140, %v192
      %v194 = vmul.f32 %v182, 3.8918573e-05
      %v195 = vadd.f32 %v194, 0.001143296
      %v196 = vmul.f32 %v182, %v195
      %v197 = vadd.f32 %v196, 0.014752088
      %v198 = vmul.f32 %v182, %v197
      %v199 = vadd.f32 %v198, 0.112945676
      %v200 = vmul.f32 %v182, %v199
      %v201 = vadd.f32 %v200, 0.4994258
      %v202 = vmul.f32 %v182, %v201
      %v203 = vadd.f32 %v202, 1.0
      %v204 = vrcp.pop %v203
      %v205 = vmul.f32 %v203, %v204
      %v206 = vsub.f32 1.0, %v205
      %v207 = vmul.f32 %v204, %v206
      %v208 = vadd.f32 %v204, %v207
      %vm209 = vweird.f32 %v203
      %vm210 = vweird.f32 %v204
      %vm211 = vmor %vm209, %vm210
      %v212 = vsel %vm211, %v204, %v208
      %v213 = vand.u32 2147483647, %v203
      %vm214 = vcmp.eq.f32.partialorder %v213, 8.507059e+37
      %v215 = vand.u32 %v203, 2147483648
      %v216 = vor.u32 1.1754944e-38, %v215
      %v217 = vsel %vm214, %v216, %v212
      %v218 = vmul.f32 %v193, %v217
      %v219 = vmin.f32 %v218, 1.0
      %v220 = vmax.f32 %v219, -1.0
      %v221 = vadd.f32 %v180, 1.0
      %v222 = vadd.f32 %v220, 1.0
      %v223 = vmul.f32 %v137, %v221
      %v224 = vmul.f32 %v138, %v222
      %225 = vadd.xlane.f32.xlu0 %v223
      %v226 = vpop.xlane.xlu0 %225
      %227 = vadd.xlane.f32.xlu0 %v224
      %v228 = vpop.xlane.xlu0 %227
      %v229 = vrcp.pop 128.0
      %v230 = vmul.f32 128.0, %v229
      %v231 = vsub.f32 1.0, %v230
      %v232 = vmul.f32 %v229, %v231
      %v233 = vadd.f32 %v229, %v232
      %vm234 = vweird.f32 %v229
      %v235 = vsel %vm234, %v229, %v233
      %v236 = vmul.f32 %v226, %v235
      %v237 = vmul.f32 %v228, %v235
      %v238 = vsub.f32 %v223, %v236
      %v239 = vsub.f32 %v224, %v237
      %v240 = vmul.f32 %v238, %v238
      %v241 = vmul.f32 %v239, %v239
      %242 = vadd.xlane.f32.xlu0 %v240
      %v243 = vpop.xlane.xlu0 %242
      %244 = vadd.xlane.f32.xlu0 %v241
      %v245 = vpop.xlane.xlu0 %244
      %v246 = vmul.f32 %v243, %v235
      %v247 = vmul.f32 %v245, %v235
      %v248 = vadd.f32 %v246, 1e-12
      %v249 = vadd.f32 %v247, 1e-12
      %v250 = vrsqrt.pop %v248
      %v251 = vmul.f32 %v250, %v248
      %v252 = vmul.f32 %v251, %v250
      %v253 = vmul.f32 0.5, %v252
      %v254 = vsub.f32 1.5, %v253
      %v255 = vmul.f32 %v250, %v254
      %vm256 = vweird.f32 %v248
      %vm257 = vweird.f32 %v250
      %vm258 = vmor %vm256, %vm257
      %v259 = vsel %vm258, %v250, %v255
      %v260 = vrsqrt.pop %v249
      %v261 = vmul.f32 %v260, %v249
      %v262 = vmul.f32 %v261, %v260
      %v263 = vmul.f32 0.5, %v262
      %v264 = vsub.f32 1.5, %v263
      %v265 = vmul.f32 %v260, %v264
      %vm266 = vweird.f32 %v249
      %vm267 = vweird.f32 %v260
      %vm268 = vmor %vm266, %vm267
      %v269 = vsel %vm268, %v260, %v265
      %v270 = vmul.f32 %v238, %v259
      %v271 = vmul.f32 %v239, %v269
      %v272 = vld [vmem:[%s3] sm:$0x1]
      %v274 = vperm.slane %v272, 0
      %v276 = vmul.f32 %v270, %v274
      %v277 = vmul.f32 %v271, %v274
      %v278 = vld [vmem:[#allocation8] sm:$0x1]
      %v280 = vperm.slane %v278, 0
      %v282 = vadd.f32 %v276, %v280
      %v283 = vadd.f32 %v277, %v280
      %284 = vst [vmem:[#allocation2] sm:$0xff] %v282
      %285 = vst [vmem:[#allocation2 + $0x8] sm:$0xff] %v283
    $region49: #{tpu_custom_call.1} parent=1 // pred_fallthru
      _
    %v286 = vld [vmem:[#allocation2] sm:$0xff]
    %v287 = vld [vmem:[#allocation2 + $0x8] sm:$0xff]
    %v288 = vld [vmem:[#allocation9] sm:$0xff]
    %v289 = vld [vmem:[#allocation9 + $0x8] sm:$0xff]
    %v290 = vld [vmem:[#allocation9 + $0x10] sm:$0xff]
    %v291 = vld [vmem:[#allocation9 + $0x18] sm:$0xff]
    %v292 = vld [vmem:[#allocation9 + $0x20] sm:$0xff]
    %v293 = vld [vmem:[#allocation9 + $0x28] sm:$0xff]
    %v294 = vld [vmem:[#allocation9 + $0x30] sm:$0xff]
    %v295 = vld [vmem:[#allocation9 + $0x38] sm:$0xff]
    %v296 = vld [vmem:[#allocation9 + $0x40] sm:$0xff]
    %v297 = vld [vmem:[#allocation9 + $0x48] sm:$0xff]
    %v298 = vld [vmem:[#allocation9 + $0x50] sm:$0xff]
    %v299 = vld [vmem:[#allocation9 + $0x58] sm:$0xff]
    %v300 = vld [vmem:[#allocation9 + $0x60] sm:$0xff]
    %v301 = vld [vmem:[#allocation9 + $0x68] sm:$0xff]
    %v302 = vld [vmem:[#allocation9 + $0x70] sm:$0xff]
    %v303 = vld [vmem:[#allocation9 + $0x78] sm:$0xff]
    %v304 = vld [vmem:[#allocation9 + $0x80] sm:$0xff]
    %v305 = vld [vmem:[#allocation9 + $0x88] sm:$0xff]
    %v306 = vld [vmem:[#allocation9 + $0x90] sm:$0xff]
    %v307 = vld [vmem:[#allocation9 + $0x98] sm:$0xff]
    %v308 = vld [vmem:[#allocation9 + $0xa0] sm:$0xff]
    %v309 = vld [vmem:[#allocation9 + $0xa8] sm:$0xff]
    %v310 = vld [vmem:[#allocation9 + $0xb0] sm:$0xff]
    %v311 = vld [vmem:[#allocation9 + $0xb8] sm:$0xff]
    %v312 = vld [vmem:[#allocation9 + $0xc0] sm:$0xff]
    %v313 = vld [vmem:[#allocation9 + $0xc8] sm:$0xff]
    %v314 = vld [vmem:[#allocation9 + $0xd0] sm:$0xff]
    %v315 = vld [vmem:[#allocation9 + $0xd8] sm:$0xff]
    %v316 = vld [vmem:[#allocation9 + $0xe0] sm:$0xff]
    %v317 = vld [vmem:[#allocation9 + $0xe8] sm:$0xff]
    %v318 = vld [vmem:[#allocation9 + $0xf0] sm:$0xff]
    %v319 = vld [vmem:[#allocation9 + $0xf8] sm:$0xff]
    %v320 = vld [vmem:[#allocation9 + $0x100] sm:$0xff]
    %v321 = vld [vmem:[#allocation9 + $0x108] sm:$0xff]
    %v322 = vld [vmem:[#allocation9 + $0x110] sm:$0xff]
    %v323 = vld [vmem:[#allocation9 + $0x118] sm:$0xff]
    %v324 = vld [vmem:[#allocation9 + $0x120] sm:$0xff]
    %v325 = vld [vmem:[#allocation9 + $0x128] sm:$0xff]
    %v326 = vld [vmem:[#allocation9 + $0x130] sm:$0xff]
    %v327 = vld [vmem:[#allocation9 + $0x138] sm:$0xff]
    %v328 = vld [vmem:[#allocation9 + $0x140] sm:$0xff]
    %v329 = vld [vmem:[#allocation9 + $0x148] sm:$0xff]
    %v330 = vld [vmem:[#allocation9 + $0x150] sm:$0xff]
    %v331 = vld [vmem:[#allocation9 + $0x158] sm:$0xff]
    %v332 = vld [vmem:[#allocation9 + $0x160] sm:$0xff]
    %v333 = vld [vmem:[#allocation9 + $0x168] sm:$0xff]
    %v334 = vld [vmem:[#allocation9 + $0x170] sm:$0xff]
    %v335 = vld [vmem:[#allocation9 + $0x178] sm:$0xff]
    %v336 = vld [vmem:[%s6] sm:$0x7]
    %v338 = vperm.slane %v336, 0
    %v339 = vperm.slane %v336, 1
    %v340 = vperm.slane %v336, 2
    %344 = vmatpush.xpose.msra.mxu0 %v303
    %345 = vmatpush.xpose.msra.mxu0 %v302
    %346 = vmatpush.xpose.msra.mxu0 %v301
    %347 = vmatpush.xpose.msra.mxu0 %v300
    %348 = vmatpush.xpose.msra.mxu0 %v299
    %349 = vmatpush.xpose.msra.mxu0 %v298
    %350 = vmatpush.xpose.msra.mxu0 %v297
    %351 = vmatpush.xpose.msra.mxu0 %v296
    %352 = vmatpush.xpose.msra.mxu0 %v295
    %353 = vmatpush.xpose.msra.mxu0 %v294
    %354 = vmatpush.xpose.msra.mxu0 %v293
    %355 = vmatpush.xpose.msra.mxu0 %v292
    %356 = vmatpush.xpose.msra.mxu0 %v291
    %357 = vmatpush.xpose.msra.mxu0 %v290
    %358 = vmatpush.xpose.msra.mxu0 %v289
    %359 = vmatpush.xpose.msra.mxu0 %v288
    %360 = vmatmul.f32.gmra.mxu0 %v286
    %v361 = vpop.f32.mrf.mxu0
    %v362 = vadd.f32 %v338, %v361
    %363 = vmatmul.f32.gmra.mxu0 %v287
    %v364 = vpop.f32.mrf.mxu0
    %v365 = vadd.f32 %v338, %v364
    %366 = vdwg.mxu0
    %367 = vmatpush.xpose.msra.mxu0 %v319
    %368 = vmatpush.xpose.msra.mxu0 %v318
    %369 = vmatpush.xpose.msra.mxu0 %v317
    %370 = vmatpush.xpose.msra.mxu0 %v316
    %371 = vmatpush.xpose.msra.mxu0 %v315
    %372 = vmatpush.xpose.msra.mxu0 %v314
    %373 = vmatpush.xpose.msra.mxu0 %v313
    %374 = vmatpush.xpose.msra.mxu0 %v312
    %375 = vmatpush.xpose.msra.mxu0 %v311
    %376 = vmatpush.xpose.msra.mxu0 %v310
    %377 = vmatpush.xpose.msra.mxu0 %v309
    %378 = vmatpush.xpose.msra.mxu0 %v308
    %379 = vmatpush.xpose.msra.mxu0 %v307
    %380 = vmatpush.xpose.msra.mxu0 %v306
    %381 = vmatpush.xpose.msra.mxu0 %v305
    %382 = vmatpush.xpose.msra.mxu0 %v304
    %383 = vmatmul.f32.gmra.mxu0 %v286
    %v384 = vpop.f32.mrf.mxu0
    %v385 = vadd.f32 %v339, %v384
    %386 = vmatmul.f32.gmra.mxu0 %v287
    %v387 = vpop.f32.mrf.mxu0
    %v388 = vadd.f32 %v339, %v387
    %389 = vdwg.mxu0
    %390 = vmatpush.xpose.msra.mxu0 %v335
    %391 = vmatpush.xpose.msra.mxu0 %v334
    %392 = vmatpush.xpose.msra.mxu0 %v333
    %393 = vmatpush.xpose.msra.mxu0 %v332
    %394 = vmatpush.xpose.msra.mxu0 %v331
    %395 = vmatpush.xpose.msra.mxu0 %v330
    %396 = vmatpush.xpose.msra.mxu0 %v329
    %397 = vmatpush.xpose.msra.mxu0 %v328
    %398 = vmatpush.xpose.msra.mxu0 %v327
    %399 = vmatpush.xpose.msra.mxu0 %v326
    %400 = vmatpush.xpose.msra.mxu0 %v325
    %401 = vmatpush.xpose.msra.mxu0 %v324
    %402 = vmatpush.xpose.msra.mxu0 %v323
    %403 = vmatpush.xpose.msra.mxu0 %v322
    %404 = vmatpush.xpose.msra.mxu0 %v321
    %405 = vmatpush.xpose.msra.mxu0 %v320
    %406 = vmatmul.f32.gmra.mxu0 %v286
    %v407 = vpop.f32.mrf.mxu0
    %v408 = vadd.f32 %v340, %v407
    %409 = vmatmul.f32.gmra.mxu0 %v287
    %v410 = vpop.f32.mrf.mxu0
    %v411 = vadd.f32 %v340, %v410
    %412 = vdwg.mxu0
    %413 = vst [vmem:[#allocation11] sm:$0xff] %v362
    %414 = vst [vmem:[#allocation11 + $0x8] sm:$0xff] %v385
    %415 = vst [vmem:[#allocation11 + $0x10] sm:$0xff] %v408
    %416 = vst [vmem:[#allocation11 + $0x18] sm:$0xff] %v365
    %417 = vst [vmem:[#allocation11 + $0x20] sm:$0xff] %v388
    %418 = vst [vmem:[#allocation11 + $0x28] sm:$0xff] %v411
    // Predicated region
    $region50: #{tpu_custom_call.1} parent=1 // pred_check
      _
    $region51: #{tpu_custom_call.1} parent=1 // pred_check_branch
      %420 = sbr.rel (0) target = $region53
    $region52: #{tpu_custom_call.1} parent=1 // pred_region
      %422 = vsyncadd [#allocation5], 0
      %s423 = sshll.u32 [#allocation11], 4
      %s424 = int_to_ptr.vmem [resolvable:$true] %s423
      %s425 = sshll.u32 %s7, 4
      %s426 = int_to_ptr.hbm [resolvable:$true] %s425
      %431 = dma.vmem_to_hbm [thread:$0]  %s424, 768, %s426, [#allocation5], 384, 384, 24
    $region53: #{tpu_custom_call.1} parent=1 // pred_fallthru
      _
    // Predicated region
    $region54: #{tpu_custom_call.1} parent=1 // pred_check
      _
    $region55: #{tpu_custom_call.1} parent=1 // pred_check_branch
      %433 = sbr.rel (0) target = $region57
    $region56: #{tpu_custom_call.1} parent=1 // pred_region
      %435 = dma.done [#allocation5], 768
    $region57: #{tpu_custom_call.1} parent=1 // pred_fallthru
      _
    %436 = vsyncpa [#allocation4], 1
    %437 = vsyncpa [#allocation7], 1
    %438 = vsyncpa [#allocation10], 1
    %439 = vsyncpa [#allocation5], 1

</llo_original>
